<compile_context>
chip_gen: v7x
topology: tpu7x:2x2x1
jax: 0.10.0
libtpu: 0.0.40
codegen_flags: <defaults>
</compile_context>

<pallas_src>
import functools

import jax
import jax.numpy as jnp
from jax.experimental import pallas as pl
from jax.experimental.pallas import tpu as pltpu

_LANE = 128
_VMEM_TILE_BUDGET = 20 * 1024 * 1024   # live tile footprint cap (all gens)
_VMEM_LIMIT_BYTES = 28 * 1024 * 1024   # explicit scoped-VMEM limit (>= v5e's
                                       # 16 MiB default, < v7x's 32 MiB default)


def _round_up(x: int, m: int) -> int:
    return ((x + m - 1) // m) * m


# ----------------------------------------------------------------------------
# Kernels
# ----------------------------------------------------------------------------
def _linear_kernel(x_ref, w_ref, b_ref, o_ref):
    # Collapsed-K path: tk == H_pad, single MXU pass per (i, j) tile.
    # No accumulator scratch, no pl.when, bias added in-register.
    o_ref[...] = (
        jnp.dot(x_ref[...], w_ref[...], preferred_element_type=jnp.float32)
        + b_ref[...]
    ).astype(o_ref.dtype)


def _linear_kernel_ksplit(x_ref, w_ref, b_ref, o_ref, acc_ref):
    # Large-H fallback: reduction axis split across the last ("arbitrary")
    # grid dim with an f32 VMEM accumulator.
    k = pl.program_id(2)

    @pl.when(k == 0)
    def _():
        # Seed the accumulator with the bias so finalize is a pure cast+store.
        acc_ref[...] = jnp.broadcast_to(b_ref[...], acc_ref.shape)

    acc_ref[...] += jnp.dot(
        x_ref[...], w_ref[...], preferred_element_type=jnp.float32
    )

    @pl.when(k == pl.num_programs(2) - 1)
    def _():
        o_ref[...] = acc_ref[...].astype(o_ref.dtype)


# ----------------------------------------------------------------------------
# Tile selection
# ----------------------------------------------------------------------------
def _divisor_tiles(dim_pad: int, cap: int):
    """Multiples of 128 that divide dim_pad, descending, capped at `cap`."""
    cands = [
        t
        for t in range(_LANE, min(cap, dim_pad) + 1, _LANE)
        if dim_pad % t == 0
    ]
    return sorted(cands, reverse=True) or [_LANE]


def _tm_candidates(B: int, cap: int = 512):
    """Row-tile candidates: multiples of 16 (bf16 sublane packing), descending."""
    t = min(_round_up(B, 16), cap)
    cands = []
    while t > 16:
        cands.append(t)
        t = _round_up(t // 2, 16)
    cands.append(16)
    return cands


def _footprint_bytes(tm, tn, tk, in_bytes, out_bytes, with_acc):
    f = 2 * (tm * tk + tk * tn) * in_bytes   # double-buffered input tiles
    f += 2 * tn * 4                          # bias row (double-buffered)
    f += 2 * tm * tn * out_bytes             # output tile (double-buffered)
    if with_acc:
        f += tm * tn * 4                     # f32 accumulator scratch
    return f


def _choose_tiles(B, H_pad, C_pad, in_bytes, out_bytes):
    tm_cands = _tm_candidates(B, 512)
    tn_cands = _divisor_tiles(C_pad, 512)

    # 1) Prefer collapsing the reduction axis (tk == H_pad): no accumulator,
    #    no K grid steps.  Maximize tm first (cuts weight re-streaming, which
    #    dominates HBM traffic for wide heads), then tn, but don't accept
    #    degenerate tiles just to collapse K.
    tm_floor = min(tm_cands[0], 256)
    tn_floor = min(tn_cands[0], 256)
    for tm in tm_cands:
        if tm < tm_floor:
            break
        for tn in tn_cands:
            if tn < tn_floor:
                continue
            if _footprint_bytes(tm, tn, H_pad, in_bytes, out_bytes, False) \
                    <= _VMEM_TILE_BUDGET:
                return tm, tn, H_pad, False

    # 2) Large-H fallback: split K, keep the f32 accumulator.
    tk_cands = _divisor_tiles(H_pad, 2048)
    for tm in tm_cands:
        for tn in tn_cands:
            for tk in tk_cands:
                if _footprint_bytes(tm, tn, tk, in_bytes, out_bytes, True) \
                        <= _VMEM_TILE_BUDGET:
                    return tm, tn, tk, True

    # Minimal tiles always fit.
    return 16, _LANE, _LANE, True


# ----------------------------------------------------------------------------
# One-time parameter prep (hoisted out of the per-call forward path)
# ----------------------------------------------------------------------------
def prepare_classifier_params(weight, bias, *, param_dtype=jnp.bfloat16):
    """Transpose (C, H) -> (H, C), cast to the MXU-native dtype, and zero-pad
    both dims to multiples of 128.  Done once; the forward then streams the
    weight straight from HBM with no per-call transpose/cast/pad pass."""
    C, H = weight.shape
    H_pad = _round_up(H, _LANE)
    C_pad = _round_up(C, _LANE)
    w_p = jnp.pad(weight.T.astype(param_dtype), ((0, H_pad - H), (0, C_pad - C)))
    b_p = jnp.pad(bias.astype(jnp.float32), (0, C_pad - C)).reshape(1, C_pad)
    return w_p, b_p


# ----------------------------------------------------------------------------
# Forward
# ----------------------------------------------------------------------------
@functools.partial(jax.jit, static_argnames=("num_classes",))
def config_model_forward(feat, w_padded, b_padded, *, num_classes):
    """ConfigModel.forward: x = classifier(feat), classifier = Linear(H, C).

    feat:     (B, H) activations
    w_padded: (H_pad, C_pad) pre-transposed / bf16 / padded weight
    b_padded: (1, C_pad) f32 bias
    returns   (B, num_classes)
    """
    B, H = feat.shape
    H_pad, C_pad = w_padded.shape
    assert H <= H_pad and num_classes <= C_pad, (H, H_pad, num_classes, C_pad)

    in_dtype = w_padded.dtype
    out_dtype = feat.dtype
    in_bytes = jnp.dtype(in_dtype).itemsize
    out_bytes = jnp.dtype(out_dtype).itemsize

    tm, tn, tk, split_k = _choose_tiles(B, H_pad, C_pad, in_bytes, out_bytes)
    B_pad = _round_up(B, tm)

    # TODO(synk): have the producer of `feat` emit it already bf16 and padded
    # to (B_pad, H_pad) (or fuse this head into that kernel) so this cast+pad
    # pass over the activations disappears.
    feat_p = jnp.pad(feat.astype(in_dtype), ((0, B_pad - B), (0, H_pad - H)))

    if not split_k:
        out_p = pl.pallas_call(
            _linear_kernel,
            out_shape=jax.ShapeDtypeStruct((B_pad, C_pad), out_dtype),
            grid=(B_pad // tm, C_pad // tn),
            in_specs=[
                pl.BlockSpec((tm, tk), lambda i, j: (i, 0)),   # feat tile
                pl.BlockSpec((tk, tn), lambda i, j: (0, j)),   # (H, C) weight
                pl.BlockSpec((1, tn), lambda i, j: (0, j)),    # bias row
            ],
            out_specs=pl.BlockSpec((tm, tn), lambda i, j: (i, j)),
            compiler_params=pltpu.CompilerParams(
                dimension_semantics=("parallel", "parallel"),
                vmem_limit_bytes=_VMEM_LIMIT_BYTES,
            ),
        )(feat_p, w_padded, b_padded)
    else:
        out_p = pl.pallas_call(
            _linear_kernel_ksplit,
            out_shape=jax.ShapeDtypeStruct((B_pad, C_pad), out_dtype),
            grid=(B_pad // tm, C_pad // tn, H_pad // tk),
            in_specs=[
                pl.BlockSpec((tm, tk), lambda i, j, k: (i, k)),
                pl.BlockSpec((tk, tn), lambda i, j, k: (k, j)),
                pl.BlockSpec((1, tn), lambda i, j, k: (0, j)),
            ],
            out_specs=pl.BlockSpec((tm, tn), lambda i, j, k: (i, j)),
            scratch_shapes=[pltpu.VMEM((tm, tn), jnp.float32)],
            compiler_params=pltpu.CompilerParams(
                dimension_semantics=("parallel", "parallel", "arbitrary"),
                vmem_limit_bytes=_VMEM_LIMIT_BYTES,
            ),
        )(feat_p, w_padded, b_padded)

    return out_p[:B, :num_classes]


if __name__ == "__main__":
    # Small shapes consistent with a classifier head on pooled features.
    batch, hidden, num_classes = 8, 32, 16

    key = jax.random.PRNGKey(0)
    k_feat, k_w, k_b = jax.random.split(key, 3)

    feat = jax.random.normal(k_feat, (batch, hidden), dtype=jnp.float32)
    # Deterministic synthetic classifier parameters (not a checkpoint).
    weight = jax.random.normal(k_w, (num_classes, hidden), dtype=jnp.float32) * 0.05
    bias = jax.random.normal(k_b, (num_classes,), dtype=jnp.float32) * 0.01

    # One-time prep: transpose / cast / pad hoisted out of the per-call path.
    w_p, b_p = prepare_classifier_params(weight, bias)
    w_p, b_p = jax.block_until_ready((w_p, b_p))

    out = config_model_forward(feat, w_p, b_p, num_classes=num_classes)
    out = jax.block_until_ready(out)
    assert out.shape == (batch, num_classes)

    # Reference with the same bf16 input rounding the MXU sees (f32 accumulate).
    feat_bf = feat.astype(jnp.bfloat16).astype(jnp.float32)
    w_bf = weight.astype(jnp.bfloat16).astype(jnp.float32)
    ref_bf16 = feat_bf @ w_bf.T + bias
    assert jnp.allclose(out, ref_bf16, atol=1e-3, rtol=1e-3)

    # Sanity check against the full-precision nn.Linear reference.
    ref_f32 = feat @ weight.T + bias
    assert jnp.allclose(out, ref_f32, atol=5e-2, rtol=5e-2)

    print("KERNEL_OK")
</pallas_src>

<mosaic_0001>
module attributes {stable_mosaic.version = 11 : i64} {
  func.func @_linear_kernel(%arg0: i32, %arg1: i32, %arg2: memref<16x128xbf16, #tpu.memory_space<vmem>>, %arg3: memref<128x128xbf16, #tpu.memory_space<vmem>>, %arg4: memref<1x128xf32, #tpu.memory_space<vmem>>, %arg5: memref<16x128xf32, #tpu.memory_space<vmem>>) attributes {dimension_semantics = [#tpu.dimension_semantics<parallel>, #tpu.dimension_semantics<parallel>], iteration_bounds = array<i64: 1, 1>, scalar_prefetch = 0 : i64, scratch_operands = 0 : i64, tpu.core_type = #tpu.core_type<tc>, window_params = [{transform_indices = @transform_0, window_bounds = array<i64: 16, 128>}, {transform_indices = @transform_1, window_bounds = array<i64: 128, 128>}, {transform_indices = @transform_2, window_bounds = array<i64: 1, 128>}, {transform_indices = @transform_3, window_bounds = array<i64: 16, 128>}]} {
    %c0 = arith.constant 0 : index
    %c0_0 = arith.constant 0 : index
    %0 = vector.load %arg2[%c0, %c0_0] : memref<16x128xbf16, #tpu.memory_space<vmem>>, vector<16x128xbf16>
    %c0_1 = arith.constant 0 : index
    %c0_2 = arith.constant 0 : index
    %1 = vector.load %arg3[%c0_1, %c0_2] : memref<128x128xbf16, #tpu.memory_space<vmem>>, vector<128x128xbf16>
    %cst = arith.constant dense<0.000000e+00> : vector<16x128xf32>
    %2 = tpu.matmul %0, %1, %cst {dimension_numbers = #tpu.dot_dimension_numbers<[1], [0], [0], [1], [0, 0, 1, 1], [], []>} : vector<16x128xbf16>, vector<128x128xbf16>, vector<16x128xf32> -> vector<16x128xf32>
    %c0_3 = arith.constant 0 : index
    %c0_4 = arith.constant 0 : index
    %3 = vector.load %arg4[%c0_3, %c0_4] : memref<1x128xf32, #tpu.memory_space<vmem>>, vector<1x128xf32>
    %4 = vector.broadcast %3 : vector<1x128xf32> to vector<16x128xf32>
    %5 = arith.addf %2, %4 : vector<16x128xf32>
    %c0_5 = arith.constant 0 : index
    %c0_6 = arith.constant 0 : index
    %6 = vector.load %arg5[%c0_5, %c0_6] : memref<16x128xf32, #tpu.memory_space<vmem>>, vector<16x128xf32>
    tpu.vector_store %arg5[%c0_5, %c0_6], %5 {strides = array<i32>} : memref<16x128xf32, #tpu.memory_space<vmem>>, vector<16x128xf32>,
    return
  }
  func.func @transform_0(%arg0: i32, %arg1: i32) -> (i32, i32) {
    %c0_i32 = arith.constant 0 : i32
    %c0_i32_0 = arith.constant 0 : i32
    return %arg0, %c0_i32 : i32, i32
  }
  func.func @transform_1(%arg0: i32, %arg1: i32) -> (i32, i32) {
    %c0_i32 = arith.constant 0 : i32
    %c0_i32_0 = arith.constant 0 : i32
    return %c0_i32, %arg1 : i32, i32
  }
  func.func @transform_2(%arg0: i32, %arg1: i32) -> (i32, i32) {
    %c0_i32 = arith.constant 0 : i32
    %c0_i32_0 = arith.constant 0 : i32
    return %c0_i32, %arg1 : i32, i32
  }
  func.func @transform_3(%arg0: i32, %arg1: i32) -> (i32, i32) {
    %c0_i32 = arith.constant 0 : i32
    return %arg0, %arg1 : i32, i32
  }
}

</mosaic_0001>

<llo_original>
// kernel: config_model_forward.1
$region0: #{config_model_forward.1}
  #allocation0 [shape = 'u32[]', space=smem, size = 0x4, offset = 0x4, fixed_abs, tag = 'smem constant byte address 0x4 - core index']
  #allocation1 [shape = 'u32[144,128]{1,0:T(1,128)}', space=vmem, size = 0x12000, scoped, tag = 'internal scratch']
  %s0 = inlined_call_operand.vmem [shape: bf16[16,128], index: 0, kind: input, shape index: {}]
  %s1 = inlined_call_operand.hbm [shape: bf16[128,128], index: 1, kind: input, shape index: {}]
  %s2 = inlined_call_operand.vmem [shape: f32[1,128], index: 2, kind: input, shape index: {}]
  %s3 = inlined_call_operand.vmem [shape: f32[16,128], index: 3, kind: output, shape index: {}]
  %s4 = sld [smem:[#allocation0]]
  $region26: #{config_model_forward.1} parent=0
    _
  %s6 = ssub.s32 1, %s4
  %s7 = scalar_select 0, %s6, %s4
  $region1: #{config_model_forward.1} parent=0
    #allocation2 [shape = 'u8[32768]{0}', space=vmem, size = 0x8000, scoped, tag = 'input window, operand 1, single buffered']
    #allocation3 [shape = 's32[1]{0}', space=sflag, size = 0x4, scoped, tag = 'scoped memory for config_model_forward.1']
    %8 = vsyncpa [#allocation3], 0
    // Predicated region
    $region2: #{config_model_forward.1} parent=1 // pred_check
      _
    $region3: #{config_model_forward.1} parent=1 // pred_check_branch
      %10 = sbr.rel (0) target = $region5
    $region4: #{config_model_forward.1} parent=1 // pred_region
      _
    $region5: #{config_model_forward.1} parent=1 // pred_fallthru
      _
    // Predicated region
    $region6: #{config_model_forward.1} parent=1 // pred_check
      _
    $region7: #{config_model_forward.1} parent=1 // pred_check_branch
      %12 = sbr.rel (0) target = $region9
    $region8: #{config_model_forward.1} parent=1 // pred_region
      %s14 = ssub.s32 1024, 1024
      %15 = vsyncadd [#allocation3], %s14
      %s16 = sshll.u32 [#allocation2], 4
      %s17 = int_to_ptr.vmem [resolvable:$true] %s16
      %22 = dma.hbm_to_vmem [thread:$0]  %s1, 1024, %s17, [#allocation3], 64, 64, 4
    $region9: #{config_model_forward.1} parent=1 // pred_fallthru
      _
    // Predicated region
    $region10: #{config_model_forward.1} parent=1 // pred_check
      _
    $region11: #{config_model_forward.1} parent=1 // pred_check_branch
      %24 = sbr.rel (0) target = $region13
    $region12: #{config_model_forward.1} parent=1 // pred_region
      _
    $region13: #{config_model_forward.1} parent=1 // pred_fallthru
      _
    // Predicated region
    $region14: #{config_model_forward.1} parent=1 // pred_check
      _
    $region15: #{config_model_forward.1} parent=1 // pred_check_branch
      %26 = sbr.rel (0) target = $region17
    $region16: #{config_model_forward.1} parent=1 // pred_region
      %27 = dma.done [#allocation3], 1024
    $region17: #{config_model_forward.1} parent=1 // pred_fallthru
      _
    %v29 = vld [vmem:[%s0] sm:$0xf]
    %v30 = vld [vmem:[%s0 + $0x4] sm:$0xf]
    %v31 = vld [vmem:[#allocation2] sm:$0xf]
    %v32 = vld [vmem:[#allocation2 + $0x4] sm:$0xf]
    %v33 = vld [vmem:[#allocation2 + $0x8] sm:$0xf]
    %v34 = vld [vmem:[#allocation2 + $0xc] sm:$0xf]
    %v35 = vld [vmem:[#allocation2 + $0x10] sm:$0xf]
    %v36 = vld [vmem:[#allocation2 + $0x14] sm:$0xf]
    %v37 = vld [vmem:[#allocation2 + $0x18] sm:$0xf]
    %v38 = vld [vmem:[#allocation2 + $0x1c] sm:$0xf]
    %v39 = vld [vmem:[#allocation2 + $0x20] sm:$0xf]
    %v40 = vld [vmem:[#allocation2 + $0x24] sm:$0xf]
    %v41 = vld [vmem:[#allocation2 + $0x28] sm:$0xf]
    %v42 = vld [vmem:[#allocation2 + $0x2c] sm:$0xf]
    %v43 = vld [vmem:[#allocation2 + $0x30] sm:$0xf]
    %v44 = vld [vmem:[#allocation2 + $0x34] sm:$0xf]
    %v45 = vld [vmem:[#allocation2 + $0x38] sm:$0xf]
    %v46 = vld [vmem:[#allocation2 + $0x3c] sm:$0xf]
    %v47 = vld [vmem:[%s2] sm:$0x1]
    %v49 = vlaneseq
    %v50 = vshrl.u32 %v49, 7
    %v51 = vsub.s32 0, %v50
    %v52 = vrot.slane %v47, %v51
    %v56 = vunpack.c.l.b16 %v29
    %v57 = vunpack.c.l.b16 %v30
    %v58 = vpack.c.b16 %v57, %v56
    %v76 = vunpack.c.l.b16 %v31
    %v77 = vunpack.c.l.b16 %v32
    %v78 = vunpack.c.l.b16 %v33
    %v79 = vunpack.c.l.b16 %v34
    %v80 = vunpack.c.l.b16 %v35
    %v81 = vunpack.c.l.b16 %v36
    %v82 = vunpack.c.l.b16 %v37
    %v83 = vunpack.c.l.b16 %v38
    %v84 = vunpack.c.l.b16 %v39
    %v85 = vunpack.c.l.b16 %v40
    %v86 = vunpack.c.l.b16 %v41
    %v87 = vunpack.c.l.b16 %v42
    %v88 = vunpack.c.l.b16 %v43
    %v89 = vunpack.c.l.b16 %v44
    %v90 = vunpack.c.l.b16 %v45
    %v91 = vunpack.c.l.b16 %v46
    %v92 = vpack.c.b16 %v77, %v76
    %v93 = vpack.c.b16 %v79, %v78
    %v94 = vpack.c.b16 %v81, %v80
    %v95 = vpack.c.b16 %v83, %v82
    %v96 = vpack.c.b16 %v85, %v84
    %v97 = vpack.c.b16 %v87, %v86
    %v98 = vpack.c.b16 %v89, %v88
    %v99 = vpack.c.b16 %v91, %v90
    %108 = vmatprep.subr.bf16.mxu0 0
    %109 = vmatpush1.bf16.msra.mxu0 %v92
    %110 = vmatprep.subr.bf16.mxu0 0
    %111 = vmatpush1.bf16.msra.mxu0 %v93
    %112 = vmatprep.subr.bf16.mxu0 0
    %113 = vmatpush1.bf16.msra.mxu0 %v94
    %114 = vmatprep.subr.bf16.mxu0 0
    %115 = vmatpush1.bf16.msra.mxu0 %v95
    %116 = vmatprep.subr.bf16.mxu0 0
    %117 = vmatpush1.bf16.msra.mxu0 %v96
    %118 = vmatprep.subr.bf16.mxu0 0
    %119 = vmatpush1.bf16.msra.mxu0 %v97
    %120 = vmatprep.subr.bf16.mxu0 0
    %121 = vmatpush1.bf16.msra.mxu0 %v98
    %122 = vmatprep.subr.bf16.mxu0 0
    %123 = vmatpush1.bf16.msra.mxu0 %v99
    %124 = vmatprep.subr.bf16.mxu0 0
    %125 = vmatpush1.bf16.msra.mxu0 0
    %126 = vmatprep.subr.bf16.mxu0 0
    %127 = vmatpush1.bf16.msra.mxu0 0
    %128 = vmatprep.subr.bf16.mxu0 0
    %129 = vmatpush1.bf16.msra.mxu0 0
    %130 = vmatprep.subr.bf16.mxu0 0
    %131 = vmatpush1.bf16.msra.mxu0 0
    %132 = vmatprep.subr.bf16.mxu0 0
    %133 = vmatpush1.bf16.msra.mxu0 0
    %134 = vmatprep.subr.bf16.mxu0 0
    %135 = vmatpush1.bf16.msra.mxu0 0
    %136 = vmatprep.subr.bf16.mxu0 0
    %137 = vmatpush1.bf16.msra.mxu0 0
    %138 = vmatprep.subr.bf16.mxu0 0
    %139 = vmatpush1.bf16.msra.mxu0 0
    %140 = vmatprep.mubr.bf16.mxu0 0
    %141 = vmatmul.mubr.bf16.gmra.mrb[0].mxu0 %v58
    %v142 = vpop.f32.mrb[0].mxu0
    %v143 = vadd.f32 %v52, %v142
    %v144 = vpop.f32.mrb[0].mxu0
    %v145 = vpop.f32.mrb[0].mxu0
    %v146 = vadd.f32 %v52, %v145
    %v147 = vpop.f32.mrb[0].mxu0
    %148 = vdwg.mxu0
    %149 = vst [vmem:[%s3] sm:$0xff] %v143
    %150 = vst [vmem:[%s3 + $0x8] sm:$0xff] %v146
    // Predicated region
    $region18: #{config_model_forward.1} parent=1 // pred_check
      _
    $region19: #{config_model_forward.1} parent=1 // pred_check_branch
      %152 = sbr.rel (0) target = $region21
    $region20: #{config_model_forward.1} parent=1 // pred_region
      _
    $region21: #{config_model_forward.1} parent=1 // pred_fallthru
      _
    // Predicated region
    $region22: #{config_model_forward.1} parent=1 // pred_check
      _
    $region23: #{config_model_forward.1} parent=1 // pred_check_branch
      %154 = sbr.rel (0) target = $region25
    $region24: #{config_model_forward.1} parent=1 // pred_region
      _
    $region25: #{config_model_forward.1} parent=1 // pred_fallthru
      _
    %155 = vsyncpa [#allocation3], 1

</llo_original>
